<compile_context>
chip_gen: v6e
topology: v6e:2x2x1
jax: 0.10.0
libtpu: 0.0.40
codegen_flags: <defaults>
</compile_context>

<pallas_src>
import functools

import jax
import jax.numpy as jnp
from jax import lax
from jax.experimental import pallas as pl
from jax.experimental.pallas import tpu as pltpu


def _round_up(x, m):
    return (x + m - 1) // m * m


def _vmem_limit_bytes():
    # Generation-aware scoped-VMEM budget (v5e/v6e: 128 MiB phys, v7x: 64 MiB).
    cap = 128 * 1024 * 1024
    try:
        info = pltpu.get_tpu_info()
        cap = getattr(info, "vmem_capacity_bytes", cap) or cap
    except Exception:
        pass
    return int(min(cap * 3 // 4, 100 * 1024 * 1024))


# --------------------------------------------------------------------------
# Path 1: stream the (padded) table tile-by-tile, counts @ emb on the MXU.
# --------------------------------------------------------------------------
def _bow_stream_kernel(x_ref, len_ref, emb_ref, o_ref, acc_ref):
    """Grid = (batch tiles, hidden tiles, vocab tiles); vocab is the reduction."""
    v_idx = pl.program_id(2)
    tile_v = emb_ref.shape[0]

    @pl.when(v_idx == 0)
    def _init():
        acc_ref[...] = jnp.zeros_like(acc_ref)

    # Fold the vocab-tile base into the small (tile_b, S) id tensor instead of
    # adding it to the wide (tile_b, tile_v) lane grid.
    x_rel = x_ref[...] - v_idx * tile_v                     # (tile_b, S) int32
    tile_b, seq = x_rel.shape

    lane_ids = lax.broadcasted_iota(jnp.int32, (tile_b, tile_v), 1)

    # counts[b, v] = #{s : x[b, s] == v + v_idx*tile_v}; int32 accumulation
    # (works on v5e too — no bf16 VALU needed), one cast before the dot.
    counts = jnp.zeros((tile_b, tile_v), jnp.int32)
    if seq <= 32:
        # Short static unroll: compare+add co-issue on the VALUs.
        for s in range(seq):
            counts = counts + (x_rel[:, s:s + 1] == lane_ids).astype(jnp.int32)
    else:
        # Long sequences: visible loop with modest unroll (bounds live ranges).
        def body(s, c):
            col = lax.dynamic_slice(x_rel, (0, s), (tile_b, 1))
            return c + (col == lane_ids).astype(jnp.int32)
        counts = lax.fori_loop(0, seq, body, counts, unroll=8)

    # Partial embedding sum for this (vocab, hidden) tile on the MXU.
    # counts <= S are exact in bf16 -> bf16 x bf16 MXU path, f32 accumulation.
    acc_ref[...] += jnp.dot(counts.astype(emb_ref.dtype), emb_ref[...],
                            preferred_element_type=jnp.float32)

    @pl.when(v_idx == pl.num_programs(2) - 1)
    def _finalize():
        # Exact divide (matches PyTorch); once per (batch, hidden) tile.
        o_ref[...] = (acc_ref[...] / len_ref[...]).astype(o_ref.dtype)


def _bag_of_words_stream(x, length, emb_weight, *, tile_b, tile_v, tile_h,
                         table_dtype):
    B, S = x.shape
    V, H = emb_weight.shape

    tile_b = min(tile_b, _round_up(B, 8))        # sublane multiple
    tile_v = min(tile_v, _round_up(V, 128))      # lane multiple
    tile_h = min(tile_h, _round_up(H, 128))      # lane-dense output stores
    B_pad = _round_up(B, tile_b)
    V_pad = _round_up(V, tile_v)
    H_pad = _round_up(H, tile_h)

    x_p = jnp.zeros((B_pad, S), jnp.int32).at[:B].set(x.astype(jnp.int32))
    len_p = jnp.ones((B_pad, 1), jnp.float32).at[:B, 0].set(
        length.astype(jnp.float32))
    emb_p = jnp.zeros((V_pad, H_pad), table_dtype).at[:V, :H].set(
        emb_weight.astype(table_dtype))

    grid = (B_pad // tile_b, H_pad // tile_h, V_pad // tile_v)

    # Count FLOPs repeat per hidden tile; the emb stream repeats per batch
    # tile (its index_map ignores the batch axis).
    flops = 2 * B_pad * V_pad * H_pad + 2 * grid[1] * B_pad * S * V_pad
    bytes_accessed = (x_p.size * 4 + len_p.size * 4 + B_pad * H_pad * 4
                      + grid[0] * emb_p.size * emb_p.dtype.itemsize)

    out = pl.pallas_call(
        _bow_stream_kernel,
        out_shape=jax.ShapeDtypeStruct((B_pad, H_pad), jnp.float32),
        grid=grid,
        in_specs=[
            pl.BlockSpec((tile_b, S), lambda b, h, v: (b, 0)),       # token ids
            pl.BlockSpec((tile_b, 1), lambda b, h, v: (b, 0)),       # lengths
            pl.BlockSpec((tile_v, tile_h), lambda b, h, v: (v, h)),  # emb tile
        ],
        out_specs=pl.BlockSpec((tile_b, tile_h), lambda b, h, v: (b, h)),
        scratch_shapes=[pltpu.VMEM((tile_b, tile_h), jnp.float32)],
        compiler_params=pltpu.CompilerParams(
            dimension_semantics=("parallel", "parallel", "arbitrary"),
            vmem_limit_bytes=_vmem_limit_bytes(),
        ),
        cost_estimate=pl.CostEstimate(
            flops=flops, transcendentals=0, bytes_accessed=bytes_accessed),
    )(x_p, len_p, emb_p)
    return out  # (B_pad, H_pad)


# --------------------------------------------------------------------------
# Path 2: DMA-gather the S rows of each example from HBM (table stays in HBM).
# --------------------------------------------------------------------------
def _bow_gather_kernel(seq, ids_ref, len_ref, emb_hbm, o_ref, buf, sem, acc):
    """Grid = (batch,); double-buffered row gather + f32 accumulation."""
    b = pl.program_id(0)

    def fetch(s, slot):
        row = ids_ref[b * seq + s]
        pltpu.make_async_copy(emb_hbm.at[pl.ds(row, 1)], buf.at[slot],
                              sem.at[slot]).start()

    acc[...] = jnp.zeros_like(acc)
    fetch(0, 0)

    @pl.loop(0, seq)
    def _(s):
        slot = s % 2
        pltpu.make_async_copy(emb_hbm.at[pl.ds(0, 1)], buf.at[slot],
                              sem.at[slot]).wait()

        @pl.when(s + 1 < seq)
        def _():
            fetch(s + 1, 1 - slot)

        acc[...] += buf[slot].astype(jnp.float32)

    # Exact divide by the example length (matches PyTorch).
    o_ref[...] = (acc[...] / len_ref[b]).reshape(o_ref.shape).astype(o_ref.dtype)


def _bag_of_words_gather(x, length, emb_weight, *, table_dtype):
    B, S = x.shape
    V, H = emb_weight.shape
    H_pad = _round_up(H, 128)

    ids = x.astype(jnp.int32).reshape(B * S)          # flat -> compact SMEM
    lens = length.astype(jnp.float32).reshape(B)
    emb_p = jnp.zeros((V, H_pad), table_dtype).at[:, :H].set(
        emb_weight.astype(table_dtype))

    out = pl.pallas_call(
        functools.partial(_bow_gather_kernel, S),
        out_shape=jax.ShapeDtypeStruct((B, 1, H_pad), jnp.float32),
        grid=(B,),
        in_specs=[
            pl.BlockSpec(memory_space=pltpu.MemorySpace.SMEM),   # token ids
            pl.BlockSpec(memory_space=pltpu.MemorySpace.SMEM),   # lengths
            pl.BlockSpec(memory_space=pl.ANY),                   # emb table (HBM)
        ],
        out_specs=pl.BlockSpec((1, 1, H_pad), lambda b: (b, 0, 0)),
        scratch_shapes=[
            pltpu.VMEM((2, 1, H_pad), emb_p.dtype),              # row double buffer
            pltpu.SemaphoreType.DMA((2,)),
            pltpu.VMEM((1, H_pad), jnp.float32),                 # accumulator
        ],
        compiler_params=pltpu.CompilerParams(
            dimension_semantics=("arbitrary",),
            vmem_limit_bytes=_vmem_limit_bytes(),
        ),
        cost_estimate=pl.CostEstimate(
            flops=2 * B * S * H_pad, transcendentals=0,
            bytes_accessed=(ids.size * 4 + lens.size * 4
                            + B * S * H_pad * emb_p.dtype.itemsize
                            + B * H_pad * 4)),
    )(ids, lens, emb_p)
    return out[:, 0, :]  # (B, H_pad)


# --------------------------------------------------------------------------
# Public wrapper
# --------------------------------------------------------------------------
def bag_of_words(x, length, emb_weight, *, method="auto",
                 tile_b=128, tile_v=256, tile_h=512,
                 table_dtype=jnp.bfloat16):
    """x: int [B, S]; length: [B]; emb_weight: [V, H] -> f32 [B, H]."""
    B, S = x.shape
    V, H = emb_weight.shape

    if method == "auto":
        # Gather touches ~B*S rows; streaming re-reads the whole table once
        # per batch tile. Prefer the gather once the table stream dominates.
        n_b_tiles = pl.cdiv(B, min(tile_b, _round_up(B, 8)))
        method = "gather" if n_b_tiles * _round_up(V, 128) > 8 * B * S else "stream"

    if method == "gather":
        out = _bag_of_words_gather(x, length, emb_weight, table_dtype=table_dtype)
    else:
        out = _bag_of_words_stream(x, length, emb_weight, tile_b=tile_b,
                                   tile_v=tile_v, tile_h=tile_h,
                                   table_dtype=table_dtype)
    return out[:B, :H]


def xavier_uniform(key, shape, dtype=jnp.float32):
    fan_in, fan_out = shape[0], shape[1]
    bound = (6.0 / (fan_in + fan_out)) ** 0.5
    return jax.random.uniform(key, shape, dtype=dtype, minval=-bound, maxval=bound)


if __name__ == "__main__":
    B, S, V, H = 8, 8, 64, 32   # batch, seq, vocab, hidden

    key = jax.random.PRNGKey(0)
    k_emb, k_x, k_len = jax.random.split(key, 3)

    # Deterministic init matching nn.init.xavier_uniform_ on emb.weight.
    emb_weight = xavier_uniform(k_emb, (V, H))

    x = jax.random.randint(k_x, (B, S), 1, V, dtype=jnp.int32)
    length = jax.random.randint(k_len, (B,), 1, S + 1).astype(jnp.float32)

    out_stream = jax.block_until_ready(
        bag_of_words(x, length, emb_weight, method="stream"))
    out_gather = jax.block_until_ready(
        bag_of_words(x, length, emb_weight, method="gather"))

    # References in plain JAX (same semantics as the PyTorch forward).
    # Kernels store/stream the table in bf16, so the tight check uses the
    # bf16-rounded weights; the loose check bounds the bf16 rounding itself.
    w_bf16 = emb_weight.astype(jnp.bfloat16).astype(jnp.float32)
    ref_bf16 = jnp.take(w_bf16, x, axis=0).sum(axis=1) / length[:, None]
    ref_f32 = jnp.take(emb_weight, x, axis=0).sum(axis=1) / length[:, None]

    assert out_stream.shape == ref_f32.shape and out_gather.shape == ref_f32.shape
    assert jnp.allclose(out_stream, ref_bf16, atol=1e-5, rtol=1e-5), "stream mismatch"
    assert jnp.allclose(out_gather, ref_bf16, atol=1e-5, rtol=1e-5), "gather mismatch"
    assert jnp.allclose(out_stream, ref_f32, atol=5e-3, rtol=5e-2), "bf16 rounding too large"

    print("KERNEL_OK")
</pallas_src>

<mosaic_0001>
module attributes {stable_mosaic.version = 11 : i64} {
  func.func @_bow_stream_kernel(%arg0: i32, %arg1: i32, %arg2: i32, %arg3: memref<8x8xi32, #tpu.memory_space<vmem>>, %arg4: memref<8x1xf32, #tpu.memory_space<vmem>>, %arg5: memref<128x128xbf16, #tpu.memory_space<vmem>>, %arg6: memref<8x128xf32, #tpu.memory_space<vmem>>, %arg7: memref<8x128xf32, #tpu.memory_space<vmem>>) attributes {dimension_semantics = [#tpu.dimension_semantics<parallel>, #tpu.dimension_semantics<parallel>, #tpu.dimension_semantics<arbitrary>], iteration_bounds = array<i64: 1, 1, 1>, scalar_prefetch = 0 : i64, scratch_operands = 1 : i64, tpu.core_type = #tpu.core_type<tc>, window_params = [{transform_indices = @transform_0, window_bounds = array<i64: 8, 8>}, {transform_indices = @transform_1, window_bounds = array<i64: 8, 1>}, {transform_indices = @transform_2, window_bounds = array<i64: 128, 128>}, {transform_indices = @transform_3, window_bounds = array<i64: 8, 128>}]} {
    %c0_i32 = arith.constant 0 : i32
    %0 = arith.cmpi eq, %arg2, %c0_i32 : i32
    %1 = arith.extui %0 : i1 to i32
    %c0_i32_0 = arith.constant 0 : i32
    %2 = arith.cmpi ne, %1, %c0_i32_0 : i32
    scf.if %2 {
      %cst_11 = arith.constant 0.000000e+00 : f32
      %58 = vector.broadcast %cst_11 : f32 to vector<8x128xf32>
      %c0_12 = arith.constant 0 : index
      %c0_13 = arith.constant 0 : index
      %59 = vector.load %arg7[%c0_12, %c0_13] : memref<8x128xf32, #tpu.memory_space<vmem>>, vector<8x128xf32>
      tpu.vector_store %arg7[%c0_12, %c0_13], %58 {strides = array<i32>} : memref<8x128xf32, #tpu.memory_space<vmem>>, vector<8x128xf32>,
    } else {
    }
    %c0 = arith.constant 0 : index
    %c0_1 = arith.constant 0 : index
    %3 = vector.load %arg3[%c0, %c0_1] : memref<8x8xi32, #tpu.memory_space<vmem>>, vector<8x8xi32>
    %c128_i32 = arith.constant 128 : i32
    %4 = arith.muli %arg2, %c128_i32 : i32
    %5 = vector.broadcast %4 : i32 to vector<8x8xi32>
    %6 = arith.subi %3, %5 : vector<8x8xi32>
    %7 = tpu.iota {dimensions = array<i32: 1>} : vector<8x128xi32>
    %c0_i32_2 = arith.constant 0 : i32
    %8 = vector.broadcast %c0_i32_2 : i32 to vector<8x128xi32>
    %9 = vector.extract_strided_slice %6 {offsets = [0, 0], sizes = [8, 1], strides = [1, 1]} : vector<8x8xi32> to vector<8x1xi32>
    %10 = vector.broadcast %9 : vector<8x1xi32> to vector<8x128xi32>
    %11 = arith.cmpi eq, %10, %7 : vector<8x128xi32>
    %12 = arith.extui %11 : vector<8x128xi1> to vector<8x128xi32>
    %13 = arith.addi %8, %12 : vector<8x128xi32>
    %14 = vector.extract_strided_slice %6 {offsets = [0, 1], sizes = [8, 1], strides = [1, 1]} : vector<8x8xi32> to vector<8x1xi32>
    %15 = vector.broadcast %14 : vector<8x1xi32> to vector<8x128xi32>
    %16 = arith.cmpi eq, %15, %7 : vector<8x128xi32>
    %17 = arith.extui %16 : vector<8x128xi1> to vector<8x128xi32>
    %18 = arith.addi %13, %17 : vector<8x128xi32>
    %19 = vector.extract_strided_slice %6 {offsets = [0, 2], sizes = [8, 1], strides = [1, 1]} : vector<8x8xi32> to vector<8x1xi32>
    %20 = vector.broadcast %19 : vector<8x1xi32> to vector<8x128xi32>
    %21 = arith.cmpi eq, %20, %7 : vector<8x128xi32>
    %22 = arith.extui %21 : vector<8x128xi1> to vector<8x128xi32>
    %23 = arith.addi %18, %22 : vector<8x128xi32>
    %24 = vector.extract_strided_slice %6 {offsets = [0, 3], sizes = [8, 1], strides = [1, 1]} : vector<8x8xi32> to vector<8x1xi32>
    %25 = vector.broadcast %24 : vector<8x1xi32> to vector<8x128xi32>
    %26 = arith.cmpi eq, %25, %7 : vector<8x128xi32>
    %27 = arith.extui %26 : vector<8x128xi1> to vector<8x128xi32>
    %28 = arith.addi %23, %27 : vector<8x128xi32>
    %29 = vector.extract_strided_slice %6 {offsets = [0, 4], sizes = [8, 1], strides = [1, 1]} : vector<8x8xi32> to vector<8x1xi32>
    %30 = vector.broadcast %29 : vector<8x1xi32> to vector<8x128xi32>
    %31 = arith.cmpi eq, %30, %7 : vector<8x128xi32>
    %32 = arith.extui %31 : vector<8x128xi1> to vector<8x128xi32>
    %33 = arith.addi %28, %32 : vector<8x128xi32>
    %34 = vector.extract_strided_slice %6 {offsets = [0, 5], sizes = [8, 1], strides = [1, 1]} : vector<8x8xi32> to vector<8x1xi32>
    %35 = vector.broadcast %34 : vector<8x1xi32> to vector<8x128xi32>
    %36 = arith.cmpi eq, %35, %7 : vector<8x128xi32>
    %37 = arith.extui %36 : vector<8x128xi1> to vector<8x128xi32>
    %38 = arith.addi %33, %37 : vector<8x128xi32>
    %39 = vector.extract_strided_slice %6 {offsets = [0, 6], sizes = [8, 1], strides = [1, 1]} : vector<8x8xi32> to vector<8x1xi32>
    %40 = vector.broadcast %39 : vector<8x1xi32> to vector<8x128xi32>
    %41 = arith.cmpi eq, %40, %7 : vector<8x128xi32>
    %42 = arith.extui %41 : vector<8x128xi1> to vector<8x128xi32>
    %43 = arith.addi %38, %42 : vector<8x128xi32>
    %44 = vector.extract_strided_slice %6 {offsets = [0, 7], sizes = [8, 1], strides = [1, 1]} : vector<8x8xi32> to vector<8x1xi32>
    %45 = vector.broadcast %44 : vector<8x1xi32> to vector<8x128xi32>
    %46 = arith.cmpi eq, %45, %7 : vector<8x128xi32>
    %47 = arith.extui %46 : vector<8x128xi1> to vector<8x128xi32>
    %48 = arith.addi %43, %47 : vector<8x128xi32>
    %c0_3 = arith.constant 0 : index
    %c0_4 = arith.constant 0 : index
    %49 = vector.load %arg7[%c0_3, %c0_4] : memref<8x128xf32, #tpu.memory_space<vmem>>, vector<8x128xf32>
    %50 = arith.sitofp %48 : vector<8x128xi32> to vector<8x128xbf16>
    %c0_5 = arith.constant 0 : index
    %c0_6 = arith.constant 0 : index
    %51 = vector.load %arg5[%c0_5, %c0_6] : memref<128x128xbf16, #tpu.memory_space<vmem>>, vector<128x128xbf16>
    %cst = arith.constant dense<0.000000e+00> : vector<8x128xf32>
    %52 = tpu.matmul %50, %51, %cst {dimension_numbers = #tpu.dot_dimension_numbers<[1], [0], [0], [1], [0, 0, 1, 1], [], []>} : vector<8x128xbf16>, vector<128x128xbf16>, vector<8x128xf32> -> vector<8x128xf32>
    %53 = arith.addf %49, %52 : vector<8x128xf32>
    %c0_7 = arith.constant 0 : index
    %c0_8 = arith.constant 0 : index
    %54 = vector.load %arg7[%c0_7, %c0_8] : memref<8x128xf32, #tpu.memory_space<vmem>>, vector<8x128xf32>
    tpu.vector_store %arg7[%c0_7, %c0_8], %53 {strides = array<i32>} : memref<8x128xf32, #tpu.memory_space<vmem>>, vector<8x128xf32>,
    %c0_i32_9 = arith.constant 0 : i32
    %55 = arith.cmpi eq, %arg2, %c0_i32_9 : i32
    %56 = arith.extui %55 : i1 to i32
    %c0_i32_10 = arith.constant 0 : i32
    %57 = arith.cmpi ne, %56, %c0_i32_10 : i32
    scf.if %57 {
      %c0_11 = arith.constant 0 : index
      %c0_12 = arith.constant 0 : index
      %58 = vector.load %arg7[%c0_11, %c0_12] : memref<8x128xf32, #tpu.memory_space<vmem>>, vector<8x128xf32>
      %c0_13 = arith.constant 0 : index
      %c0_14 = arith.constant 0 : index
      %59 = vector.load %arg4[%c0_13, %c0_14] : memref<8x1xf32, #tpu.memory_space<vmem>>, vector<8x1xf32>
      %60 = vector.broadcast %59 : vector<8x1xf32> to vector<8x128xf32>
      %61 = arith.divf %58, %60 : vector<8x128xf32>
      %c0_15 = arith.constant 0 : index
      %c0_16 = arith.constant 0 : index
      %62 = vector.load %arg6[%c0_15, %c0_16] : memref<8x128xf32, #tpu.memory_space<vmem>>, vector<8x128xf32>
      tpu.vector_store %arg6[%c0_15, %c0_16], %61 {strides = array<i32>} : memref<8x128xf32, #tpu.memory_space<vmem>>, vector<8x128xf32>,
    } else {
    }
    return
  }
  func.func @transform_0(%arg0: i32, %arg1: i32, %arg2: i32) -> (i32, i32) {
    %c0_i32 = arith.constant 0 : i32
    %c0_i32_0 = arith.constant 0 : i32
    return %arg0, %c0_i32 : i32, i32
  }
  func.func @transform_1(%arg0: i32, %arg1: i32, %arg2: i32) -> (i32, i32) {
    %c0_i32 = arith.constant 0 : i32
    %c0_i32_0 = arith.constant 0 : i32
    return %arg0, %c0_i32 : i32, i32
  }
  func.func @transform_2(%arg0: i32, %arg1: i32, %arg2: i32) -> (i32, i32) {
    %c0_i32 = arith.constant 0 : i32
    return %arg2, %arg1 : i32, i32
  }
  func.func @transform_3(%arg0: i32, %arg1: i32, %arg2: i32) -> (i32, i32) {
    %c0_i32 = arith.constant 0 : i32
    return %arg0, %arg1 : i32, i32
  }
}

</mosaic_0001>

<llo_original>
// kernel: tpu_custom_call.1
$region0: #{tpu_custom_call.1}
  #allocation0 [shape = 'u32[]', space=smem, size = 0x4, offset = 0x4, fixed_abs, tag = 'smem constant byte address 0x4 - core index']
  #allocation1 [shape = 'u32[144,128]{1,0:T(1,128)}', space=vmem, size = 0x12000, scoped, tag = 'internal scratch']
  #allocation2 [shape = 'f32[8,128]{1,0:T(8,128)}', space=vmem, size = 0x1000, scoped, tag = 'scratch operand']
  %s0 = inlined_call_operand.vmem [shape: s32[8,8], index: 0, kind: input, shape index: {}]
  %s1 = inlined_call_operand.vmem [shape: f32[8,1], index: 1, kind: input, shape index: {}]
  %s2 = inlined_call_operand.hbm [shape: bf16[128,128], index: 2, kind: input, shape index: {}]
  %s3 = inlined_call_operand.hbm [shape: f32[8,128], index: 3, kind: output, shape index: {}]
  %s4 = sld [smem:[#allocation0]]
  $region34: #{tpu_custom_call.1} parent=0
    _
  %s6 = ssub.s32 1, %s4
  %s7 = scalar_select 0, %s6, %s4
  $region1: #{tpu_custom_call.1} parent=0
    #allocation3 [shape = 'u8[32768]{0}', space=vmem, size = 0x8000, scoped, tag = 'input window, operand 2, single buffered']
    #allocation4 [shape = 's32[1]{0}', space=sflag, size = 0x4, scoped, tag = 'scoped memory for tpu_custom_call.1']
    #allocation5 [shape = 's32[1]{0}', space=sflag, size = 0x4, scoped, tag = 'scoped memory for tpu_custom_call.1']
    #allocation6 [shape = 'u8[4096]{0}', space=vmem, size = 0x1000, scoped, tag = 'output window, operand 0, single buffered']
    %8 = vsyncpa [#allocation4], 0
    %9 = vsyncpa [#allocation5], 0
    // Predicated region
    $region2: #{tpu_custom_call.1} parent=1 // pred_check
      _
    $region3: #{tpu_custom_call.1} parent=1 // pred_check_branch
      %11 = sbr.rel (0) target = $region5
    $region4: #{tpu_custom_call.1} parent=1 // pred_region
      _
    $region5: #{tpu_custom_call.1} parent=1 // pred_fallthru
      _
    // Predicated region
    $region6: #{tpu_custom_call.1} parent=1 // pred_check
      _
    $region7: #{tpu_custom_call.1} parent=1 // pred_check_branch
      %13 = sbr.rel (0) target = $region9
    $region8: #{tpu_custom_call.1} parent=1 // pred_region
      _
    $region9: #{tpu_custom_call.1} parent=1 // pred_fallthru
      _
    // Predicated region
    $region10: #{tpu_custom_call.1} parent=1 // pred_check
      _
    $region11: #{tpu_custom_call.1} parent=1 // pred_check_branch
      %15 = sbr.rel (0) target = $region13
    $region12: #{tpu_custom_call.1} parent=1 // pred_region
      %s17 = ssub.s32 1024, 1024
      %18 = vsyncadd [#allocation4], %s17
      %s19 = sshll.u32 [#allocation3], 4
      %s20 = int_to_ptr.vmem [resolvable:$true] %s19
      %25 = dma.hbm_to_vmem [thread:$0]  %s2, 1024, %s20, [#allocation4], 64, 64, 4
    $region13: #{tpu_custom_call.1} parent=1 // pred_fallthru
      _
    // Predicated region
    $region14: #{tpu_custom_call.1} parent=1 // pred_check
      _
    $region15: #{tpu_custom_call.1} parent=1 // pred_check_branch
      %27 = sbr.rel (0) target = $region17
    $region16: #{tpu_custom_call.1} parent=1 // pred_region
      %28 = dma.done [#allocation4], 1024
    $region17: #{tpu_custom_call.1} parent=1 // pred_fallthru
      _
    %p30 = scmp.eq.s32.totalorder 0, 0
    // Predicated region
    $region18: #{tpu_custom_call.1} parent=1 // pred_check
      %p31 = pneg %p30
    $region19: #{tpu_custom_call.1} parent=1 // pred_check_branch
      %33 = sbr.rel (%p31) target = $region21
    $region20: #{tpu_custom_call.1} parent=1 // pred_region
      %34 = vst [vmem:[#allocation2] sm:$0xff] 0.0
    $region21: #{tpu_custom_call.1} parent=1 // pred_fallthru
      _
    %v35 = vld [vmem:[%s0] sm:$0xff]
    %s36 = smul.u32 0, 128
    %v37 = vstv %s36
    %v38 = vsub.s32 %v35, %v37
    %v39 = vlaneseq
    %v40 = vand.u32 %v39, 127
    %41 = vset.pattern.permute.xlu0 0
    %42 = vperm.xlu0 %41, %v38
    %v43 = vpop.permute.xlu0 %42
    %vm44 = vcmp.eq.s32.totalorder %v43, %v40
    %v45 = vsel %vm44, 1, 0
    %46 = vset.pattern.permute.xlu0 1
    %47 = vperm.xlu0 %46, %v38
    %v48 = vpop.permute.xlu0 %47
    %vm49 = vcmp.eq.s32.totalorder %v48, %v40
    %v50 = vsel %vm49, 1, 0
    %v51 = vadd.s32 %v45, %v50
    %52 = vset.pattern.permute.xlu0 2
    %53 = vperm.xlu0 %52, %v38
    %v54 = vpop.permute.xlu0 %53
    %vm55 = vcmp.eq.s32.totalorder %v54, %v40
    %v56 = vsel %vm55, 1, 0
    %v57 = vadd.s32 %v51, %v56
    %58 = vset.pattern.permute.xlu0 3
    %59 = vperm.xlu0 %58, %v38
    %v60 = vpop.permute.xlu0 %59
    %vm61 = vcmp.eq.s32.totalorder %v60, %v40
    %v62 = vsel %vm61, 1, 0
    %v63 = vadd.s32 %v57, %v62
    %64 = vset.pattern.permute.xlu0 4
    %65 = vperm.xlu0 %64, %v38
    %v66 = vpop.permute.xlu0 %65
    %vm67 = vcmp.eq.s32.totalorder %v66, %v40
    %v68 = vsel %vm67, 1, 0
    %v69 = vadd.s32 %v63, %v68
    %70 = vset.pattern.permute.xlu0 5
    %71 = vperm.xlu0 %70, %v38
    %v72 = vpop.permute.xlu0 %71
    %vm73 = vcmp.eq.s32.totalorder %v72, %v40
    %v74 = vsel %vm73, 1, 0
    %v75 = vadd.s32 %v69, %v74
    %76 = vset.pattern.permute.xlu0 6
    %77 = vperm.xlu0 %76, %v38
    %v78 = vpop.permute.xlu0 %77
    %vm79 = vcmp.eq.s32.totalorder %v78, %v40
    %v80 = vsel %vm79, 1, 0
    %v81 = vadd.s32 %v75, %v80
    %82 = vset.pattern.permute.xlu0 7
    %83 = vperm.xlu0 %82, %v38
    %v84 = vpop.permute.xlu0 %83
    %vm85 = vcmp.eq.s32.totalorder %v84, %v40
    %v86 = vsel %vm85, 1, 0
    %v87 = vadd.s32 %v81, %v86
    %v88 = vld [vmem:[#allocation2] sm:$0xff]
    %v89 = vcvt.s32.f32 %v87
    %v90 = vpack.c.bf16 %v89, %v89
    %v91 = vld [vmem:[#allocation3] sm:$0xf]
    %v92 = vld [vmem:[#allocation3 + $0x4] sm:$0xf]
    %v93 = vld [vmem:[#allocation3 + $0x8] sm:$0xf]
    %v94 = vld [vmem:[#allocation3 + $0xc] sm:$0xf]
    %v95 = vld [vmem:[#allocation3 + $0x10] sm:$0xf]
    %v96 = vld [vmem:[#allocation3 + $0x14] sm:$0xf]
    %v97 = vld [vmem:[#allocation3 + $0x18] sm:$0xf]
    %v98 = vld [vmem:[#allocation3 + $0x1c] sm:$0xf]
    %v99 = vld [vmem:[#allocation3 + $0x20] sm:$0xf]
    %v100 = vld [vmem:[#allocation3 + $0x24] sm:$0xf]
    %v101 = vld [vmem:[#allocation3 + $0x28] sm:$0xf]
    %v102 = vld [vmem:[#allocation3 + $0x2c] sm:$0xf]
    %v103 = vld [vmem:[#allocation3 + $0x30] sm:$0xf]
    %v104 = vld [vmem:[#allocation3 + $0x34] sm:$0xf]
    %v105 = vld [vmem:[#allocation3 + $0x38] sm:$0xf]
    %v106 = vld [vmem:[#allocation3 + $0x3c] sm:$0xf]
    %v123 = vunpack.c.l.b16 %v91
    %v124 = vunpack.c.l.b16 %v92
    %v125 = vunpack.c.l.b16 %v93
    %v126 = vunpack.c.l.b16 %v94
    %v127 = vunpack.c.l.b16 %v95
    %v128 = vunpack.c.l.b16 %v96
    %v129 = vunpack.c.l.b16 %v97
    %v130 = vunpack.c.l.b16 %v98
    %v131 = vunpack.c.l.b16 %v99
    %v132 = vunpack.c.l.b16 %v100
    %v133 = vunpack.c.l.b16 %v101
    %v134 = vunpack.c.l.b16 %v102
    %v135 = vunpack.c.l.b16 %v103
    %v136 = vunpack.c.l.b16 %v104
    %v137 = vunpack.c.l.b16 %v105
    %v138 = vunpack.c.l.b16 %v106
    %v139 = vpack.c.b16 %v124, %v123
    %v140 = vpack.c.b16 %v126, %v125
    %v141 = vpack.c.b16 %v128, %v127
    %v142 = vpack.c.b16 %v130, %v129
    %v143 = vpack.c.b16 %v132, %v131
    %v144 = vpack.c.b16 %v134, %v133
    %v145 = vpack.c.b16 %v136, %v135
    %v146 = vpack.c.b16 %v138, %v137
    %155 = vmatprep.subr.bf16.mxu0 0
    %156 = vmatpush1.bf16.msra.mxu0 %v146
    %157 = vmatprep.subr.bf16.mxu0 0
    %158 = vmatpush1.bf16.msra.mxu0 %v145
    %159 = vmatprep.subr.bf16.mxu0 0
    %160 = vmatpush1.bf16.msra.mxu0 %v144
    %161 = vmatprep.subr.bf16.mxu0 0
    %162 = vmatpush1.bf16.msra.mxu0 %v143
    %163 = vmatprep.subr.bf16.mxu0 0
    %164 = vmatpush1.bf16.msra.mxu0 %v142
    %165 = vmatprep.subr.bf16.mxu0 0
    %166 = vmatpush1.bf16.msra.mxu0 %v141
    %167 = vmatprep.subr.bf16.mxu0 0
    %168 = vmatpush1.bf16.msra.mxu0 %v140
    %169 = vmatprep.subr.bf16.mxu0 0
    %170 = vmatpush1.bf16.msra.mxu0 %v139
    %171 = vmatprep.subr.bf16.mxu0 0
    %172 = vmatpush2.bf16.msra.mxu0 0
    %173 = vmatprep.subr.bf16.mxu0 0
    %174 = vmatpush2.bf16.msra.mxu0 0
    %175 = vmatprep.subr.bf16.mxu0 0
    %176 = vmatpush2.bf16.msra.mxu0 0
    %177 = vmatprep.subr.bf16.mxu0 0
    %178 = vmatpush2.bf16.msra.mxu0 0
    %179 = vmatprep.subr.bf16.mxu0 0
    %180 = vmatpush2.bf16.msra.mxu0 0
    %181 = vmatprep.subr.bf16.mxu0 0
    %182 = vmatpush2.bf16.msra.mxu0 0
    %183 = vmatprep.subr.bf16.mxu0 0
    %184 = vmatpush2.bf16.msra.mxu0 0
    %185 = vmatprep.subr.bf16.mxu0 0
    %186 = vmatpush2.bf16.msra.mxu0 0
    %187 = vmatprep.mubr.bf16.mxu0 0
    %188 = vmatmul.mubr.bf16.gmra.mxu0 %v90
    %v189 = vpop.f32.mrf.mxu0
    %v190 = vadd.f32 0.0, %v189
    %v191 = vpop.f32.mrf.mxu0
    %v192 = vpop.f32.mrf.mxu0
    %v193 = vpop.f32.mrf.mxu0
    %194 = vdwg.mxu0
    %v195 = vadd.f32 %v88, %v190
    %196 = vst [vmem:[#allocation2] sm:$0xff] %v195
    // Predicated region
    $region22: #{tpu_custom_call.1} parent=1 // pred_check
      %p197 = pneg %p30
    $region23: #{tpu_custom_call.1} parent=1 // pred_check_branch
      %199 = sbr.rel (%p197) target = $region25
    $region24: #{tpu_custom_call.1} parent=1 // pred_region
      %v200 = vld [vmem:[#allocation2] sm:$0xff]
      %v201 = vld [vmem:[%s1] sm:$0xff]
      %203 = vset.pattern.permute.xlu0 0
      %204 = vperm.xlu0 %203, %v201
      %v205 = vpop.permute.xlu0 %204
      %v207 = vrcp.pop %v205
      %v208 = vmul.f32 %v200, %v207
      %209 = vst [vmem:[#allocation6] sm:$0xff] %v208
    $region25: #{tpu_custom_call.1} parent=1 // pred_fallthru
      _
    // Predicated region
    $region26: #{tpu_custom_call.1} parent=1 // pred_check
      _
    $region27: #{tpu_custom_call.1} parent=1 // pred_check_branch
      %211 = sbr.rel (0) target = $region29
    $region28: #{tpu_custom_call.1} parent=1 // pred_region
      %s213 = ssub.s32 128, 128
      %214 = vsyncadd [#allocation5], %s213
      %s216 = sshll.u32 [#allocation6], 4
      %s217 = int_to_ptr.vmem [resolvable:$true] %s216
      %219 = dma.vmem_to_hbm [thread:$0]  %s217, 128, %s3, [#allocation5]
    $region29: #{tpu_custom_call.1} parent=1 // pred_fallthru
      _
    // Predicated region
    $region30: #{tpu_custom_call.1} parent=1 // pred_check
      _
    $region31: #{tpu_custom_call.1} parent=1 // pred_check_branch
      %221 = sbr.rel (0) target = $region33
    $region32: #{tpu_custom_call.1} parent=1 // pred_region
      %222 = dma.done [#allocation5], 128
    $region33: #{tpu_custom_call.1} parent=1 // pred_fallthru
      _
    %223 = vsyncpa [#allocation4], 1
    %224 = vsyncpa [#allocation5], 1

</llo_original>
